<compile_context>
chip_gen: v7x
topology: tpu7x:2x2x1
jax: 0.10.0
libtpu: 0.0.40
codegen_flags: <defaults>
</compile_context>

<pallas_src>
import functools

import numpy as np
import jax
import jax.numpy as jnp
from jax.experimental import pallas as pl
from jax.experimental.pallas import tpu as pltpu

BN_EPS = 1e-5
_TARGET_ROWS_PER_TILE = 2048   # ~ (t, v) rows of output per tile


def _compiler_params(dimension_semantics):
    cp_cls = getattr(pltpu, "CompilerParams", None)
    if cp_cls is None:  # older JAX spelling
        cp_cls = pltpu.TPUCompilerParams
    return cp_cls(dimension_semantics=dimension_semantics)


def _pick_tile_t(t_out, v):
    """Largest t-tile that divides T_out, is sublane friendly (mult of 8 or
    full extent), and keeps ~_TARGET_ROWS_PER_TILE (t, v) rows per block."""
    target = max(1, _TARGET_ROWS_PER_TILE // max(v, 1))
    if t_out <= target:
        return t_out
    for cand in range(min(target, t_out), 0, -1):
        if t_out % cand == 0 and cand % 8 == 0:
            return cand
    return t_out


def _conv_stats_kernel(x_ref, w_ref, y_ref, stats_ref, *,
                       k_taps, tile_t, stride, dilation):
    """Pass 1: K-tap temporal conv as shifted-window matmuls + BN partials.

    x_ref:     [T_pad, V*Cin]    whole padded time axis of one sample
                                 (resident across the t-tile grid axis)
    w_ref:     [K, V*Cin, V*Cout]  block-diagonal per-tap weights
    y_ref:     [tile_t, V*Cout]    pre-BN conv output tile (lane dense)
    stats_ref: [2, V*Cout]         per-tile [sum ; sum of squares]
    """
    tt = pl.program_id(1)
    t0 = tt * (tile_t * stride)

    def tap(k):
        start = t0 + k * dilation
        if stride == 1:
            xk = x_ref[pl.ds(start, tile_t), :]
        else:
            xk = x_ref[pl.ds(start, tile_t, stride=stride), :]
        return jnp.dot(xk, w_ref[k], preferred_element_type=jnp.float32)

    acc = tap(0)
    for k in range(1, k_taps):
        acc = acc + tap(k)

    y_ref[...] = acc
    s = jnp.sum(acc, axis=0, keepdims=True)
    ss = jnp.sum(acc * acc, axis=0, keepdims=True)
    stats_ref[...] = jnp.concatenate([s, ss], axis=0)


def _bn_apply_kernel(y_ref, scale_ref, shift_ref, o_ref):
    """Pass 2: per-lane (= per output channel) affine y*scale + shift."""
    o_ref[...] = y_ref[...] * scale_ref[...] + shift_ref[...]


def temporal_conv_bn(x, weight, bias, gamma, beta, *, kernel_size,
                     stride=1, dilation=1):
    """x: [N, Cin, T, V] (NCHW). weight: [Cout, Cin, K, 1]. Returns NCHW."""
    del bias  # exactly cancelled by training-mode BN mean subtraction
    N, Cin, T, V = x.shape
    Cout = weight.shape[0]
    K = kernel_size
    pad = (K + (K - 1) * (dilation - 1) - 1) // 2
    T_pad = T + 2 * pad
    T_out = (T_pad - dilation * (K - 1) - 1) // stride + 1

    VCi, VCo = V * Cin, V * Cout
    tile_t = _pick_tile_t(T_out, V)
    ntt = T_out // tile_t

    # ---- glue: one layout pass, no K-fold im2col copy ----
    x_p = jnp.pad(x, ((0, 0), (0, 0), (pad, pad), (0, 0)))
    x_r = jnp.transpose(x_p, (0, 2, 3, 1)).reshape(N, T_pad, VCi)
    x_r = x_r.astype(jnp.float32)

    # Block-diagonal per-tap weights: W[k, v*Cin+ci, v*Cout+co] = w[co, ci, k].
    # TODO(synk): for very large V*C the block-diagonal weight (V x inflation)
    # should be replaced by a channels-in-lanes layout with [K, Cin, Cout] taps.
    w_tap = jnp.transpose(weight[..., 0], (2, 1, 0)).astype(jnp.float32)  # [K,Cin,Cout]
    eye_v = jnp.eye(V, dtype=jnp.float32)
    w_bd = jnp.einsum('vu,kio->kviuo', eye_v, w_tap).reshape(K, VCi, VCo)

    # ---- pass 1: conv + per-tile BN partial sums ----
    kernel1 = functools.partial(_conv_stats_kernel, k_taps=K, tile_t=tile_t,
                                stride=stride, dilation=dilation)
    y_pre, stats = pl.pallas_call(
        kernel1,
        grid=(N, ntt),
        in_specs=[
            pl.BlockSpec((None, T_pad, VCi), lambda n, t: (n, 0, 0)),
            pl.BlockSpec((K, VCi, VCo), lambda n, t: (0, 0, 0)),
        ],
        out_specs=[
            pl.BlockSpec((None, tile_t, VCo), lambda n, t: (n, t, 0)),
            pl.BlockSpec((None, 2, VCo), lambda n, t: (n * ntt + t, 0, 0)),
        ],
        out_shape=[
            jax.ShapeDtypeStruct((N, T_out, VCo), jnp.float32),
            jax.ShapeDtypeStruct((N * ntt, 2, VCo), jnp.float32),
        ],
        compiler_params=_compiler_params(("parallel", "parallel")),
    )(x_r, w_bd)

    # ---- glue: fold partial stats -> per-channel scale / shift (once) ----
    cnt = jnp.float32(N * T_out * V)
    s = stats[:, 0, :].reshape(-1, V, Cout).sum(axis=(0, 1))
    ss = stats[:, 1, :].reshape(-1, V, Cout).sum(axis=(0, 1))
    mean = s / cnt
    var = ss / cnt - mean * mean            # biased variance (BN training mode)
    scale = gamma.astype(jnp.float32) * jax.lax.rsqrt(var + BN_EPS)
    shift = beta.astype(jnp.float32) - mean * scale
    scale_lane = jnp.tile(scale, V).reshape(1, VCo)   # lane index = v*Cout+co
    shift_lane = jnp.tile(shift, V).reshape(1, VCo)

    # ---- pass 2: tiled affine normalize (lane-dense stores) ----
    y_norm = pl.pallas_call(
        _bn_apply_kernel,
        grid=(N, ntt),
        in_specs=[
            pl.BlockSpec((None, tile_t, VCo), lambda n, t: (n, t, 0)),
            pl.BlockSpec((1, VCo), lambda n, t: (0, 0)),
            pl.BlockSpec((1, VCo), lambda n, t: (0, 0)),
        ],
        out_specs=pl.BlockSpec((None, tile_t, VCo), lambda n, t: (n, t, 0)),
        out_shape=jax.ShapeDtypeStruct((N, T_out, VCo), jnp.float32),
        compiler_params=_compiler_params(("parallel", "parallel")),
    )(y_pre, scale_lane, shift_lane)

    y = y_norm.reshape(N, T_out, V, Cout)
    return jnp.transpose(y, (0, 3, 1, 2))               # [N, Cout, T_out, V]


def _reference(x, weight, bias, gamma, beta, *, kernel_size, stride=1,
               dilation=1):
    """Pure-JAX reference matching the PyTorch forward."""
    K = kernel_size
    pad = (K + (K - 1) * (dilation - 1) - 1) // 2
    y = jax.lax.conv_general_dilated(
        x, weight,
        window_strides=(stride, 1),
        padding=((pad, pad), (0, 0)),
        rhs_dilation=(dilation, 1),
        dimension_numbers=('NCHW', 'OIHW', 'NCHW'))
    y = y + bias.reshape(1, -1, 1, 1)
    mean = jnp.mean(y, axis=(0, 2, 3), keepdims=True)
    var = jnp.mean((y - mean) ** 2, axis=(0, 2, 3), keepdims=True)
    y = (y - mean) * jax.lax.rsqrt(var + BN_EPS)
    return y * gamma.reshape(1, -1, 1, 1) + beta.reshape(1, -1, 1, 1)


if __name__ == "__main__":
    # Small shapes consistent with the module: N=2, Cin=4, T=16, V=16,
    # out_channels=8, kernel_size=3, stride=1, dilation=1.
    N, Cin, Cout, T, V = 2, 4, 8, 16, 16
    K, STRIDE, DIL = 3, 1, 1

    key = jax.random.PRNGKey(0)
    kx, kw, kb, kg, kbeta = jax.random.split(key, 5)
    x = jax.random.normal(kx, (N, Cin, T, V), dtype=jnp.float32)
    weight = 0.1 * jax.random.normal(kw, (Cout, Cin, K, 1), dtype=jnp.float32)
    bias = 0.1 * jax.random.normal(kb, (Cout,), dtype=jnp.float32)
    gamma = 1.0 + 0.1 * jax.random.normal(kg, (Cout,), dtype=jnp.float32)
    beta = 0.1 * jax.random.normal(kbeta, (Cout,), dtype=jnp.float32)

    out = temporal_conv_bn(x, weight, bias, gamma, beta,
                           kernel_size=K, stride=STRIDE, dilation=DIL)
    out = jax.block_until_ready(out)

    ref = _reference(x, weight, bias, gamma, beta,
                     kernel_size=K, stride=STRIDE, dilation=DIL)
    ref = jax.block_until_ready(ref)

    assert out.shape == (N, Cout, T, V), out.shape
    np.testing.assert_allclose(np.asarray(out), np.asarray(ref),
                               rtol=1e-4, atol=1e-4)
    print("KERNEL_OK")
</pallas_src>

<mosaic_0001>
module attributes {stable_mosaic.version = 11 : i64} {
  func.func @_conv_stats_kernel(%arg0: i32, %arg1: i32, %arg2: memref<1x18x64xf32, #tpu.memory_space<vmem>>, %arg3: memref<3x64x128xf32, #tpu.memory_space<vmem>>, %arg4: memref<1x16x128xf32, #tpu.memory_space<vmem>>, %arg5: memref<1x2x128xf32, #tpu.memory_space<vmem>>) attributes {dimension_semantics = [#tpu.dimension_semantics<parallel>, #tpu.dimension_semantics<parallel>], iteration_bounds = array<i64: 2, 1>, scalar_prefetch = 0 : i64, scratch_operands = 0 : i64, tpu.core_type = #tpu.core_type<tc>, window_params = [{transform_indices = @transform_0, window_bounds = array<i64: 1, 18, 64>}, {pipeline_mode = #tpu.pipeline_mode<synchronous>, transform_indices = @transform_1, window_bounds = array<i64: 3, 64, 128>}, {transform_indices = @transform_2, window_bounds = array<i64: 1, 16, 128>}, {transform_indices = @transform_3, window_bounds = array<i64: 1, 2, 128>}]} {
    %c16_i32 = arith.constant 16 : i32
    %0 = arith.muli %arg1, %c16_i32 : i32
    %c0_i32 = arith.constant 0 : i32
    %1 = arith.addi %0, %c0_i32 : i32
    %c0 = arith.constant 0 : index
    %2 = arith.index_cast %1 : i32 to index
    %c0_0 = arith.constant 0 : index
    %3 = vector.load %arg2[%c0, %2, %c0_0] : memref<1x18x64xf32, #tpu.memory_space<vmem>>, vector<1x16x64xf32>
    %4 = vector.shape_cast %3 : vector<1x16x64xf32> to vector<16x64xf32>
    %c0_1 = arith.constant 0 : index
    %c0_2 = arith.constant 0 : index
    %c0_3 = arith.constant 0 : index
    %5 = vector.load %arg3[%c0_1, %c0_2, %c0_3] : memref<3x64x128xf32, #tpu.memory_space<vmem>>, vector<1x64x128xf32>
    %6 = vector.shape_cast %5 : vector<1x64x128xf32> to vector<64x128xf32>
    %cst = arith.constant dense<0.000000e+00> : vector<16x128xf32>
    %7 = tpu.matmul %4, %6, %cst {dimension_numbers = #tpu.dot_dimension_numbers<[1], [0], [0], [1], [0, 0, 1, 1], [], []>} : vector<16x64xf32>, vector<64x128xf32>, vector<16x128xf32> -> vector<16x128xf32>
    %c1_i32 = arith.constant 1 : i32
    %8 = arith.addi %0, %c1_i32 : i32
    %c0_4 = arith.constant 0 : index
    %9 = arith.index_cast %8 : i32 to index
    %c0_5 = arith.constant 0 : index
    %10 = vector.load %arg2[%c0_4, %9, %c0_5] : memref<1x18x64xf32, #tpu.memory_space<vmem>>, vector<1x16x64xf32>
    %11 = vector.shape_cast %10 : vector<1x16x64xf32> to vector<16x64xf32>
    %c1 = arith.constant 1 : index
    %c0_6 = arith.constant 0 : index
    %c0_7 = arith.constant 0 : index
    %12 = vector.load %arg3[%c1, %c0_6, %c0_7] : memref<3x64x128xf32, #tpu.memory_space<vmem>>, vector<1x64x128xf32>
    %13 = vector.shape_cast %12 : vector<1x64x128xf32> to vector<64x128xf32>
    %cst_8 = arith.constant dense<0.000000e+00> : vector<16x128xf32>
    %14 = tpu.matmul %11, %13, %cst_8 {dimension_numbers = #tpu.dot_dimension_numbers<[1], [0], [0], [1], [0, 0, 1, 1], [], []>} : vector<16x64xf32>, vector<64x128xf32>, vector<16x128xf32> -> vector<16x128xf32>
    %15 = arith.addf %7, %14 : vector<16x128xf32>
    %c2_i32 = arith.constant 2 : i32
    %16 = arith.addi %0, %c2_i32 : i32
    %c0_9 = arith.constant 0 : index
    %17 = arith.index_cast %16 : i32 to index
    %c0_10 = arith.constant 0 : index
    %18 = vector.load %arg2[%c0_9, %17, %c0_10] : memref<1x18x64xf32, #tpu.memory_space<vmem>>, vector<1x16x64xf32>
    %19 = vector.shape_cast %18 : vector<1x16x64xf32> to vector<16x64xf32>
    %c2 = arith.constant 2 : index
    %c0_11 = arith.constant 0 : index
    %c0_12 = arith.constant 0 : index
    %20 = vector.load %arg3[%c2, %c0_11, %c0_12] : memref<3x64x128xf32, #tpu.memory_space<vmem>>, vector<1x64x128xf32>
    %21 = vector.shape_cast %20 : vector<1x64x128xf32> to vector<64x128xf32>
    %cst_13 = arith.constant dense<0.000000e+00> : vector<16x128xf32>
    %22 = tpu.matmul %19, %21, %cst_13 {dimension_numbers = #tpu.dot_dimension_numbers<[1], [0], [0], [1], [0, 0, 1, 1], [], []>} : vector<16x64xf32>, vector<64x128xf32>, vector<16x128xf32> -> vector<16x128xf32>
    %23 = arith.addf %15, %22 : vector<16x128xf32>
    %c0_14 = arith.constant 0 : index
    %c0_15 = arith.constant 0 : index
    %c0_16 = arith.constant 0 : index
    %24 = vector.load %arg4[%c0_14, %c0_15, %c0_16] : memref<1x16x128xf32, #tpu.memory_space<vmem>>, vector<1x16x128xf32>
    %25 = vector.shape_cast %24 : vector<1x16x128xf32> to vector<16x128xf32>
    %26 = vector.shape_cast %23 : vector<16x128xf32> to vector<1x16x128xf32>
    tpu.vector_store %arg4[%c0_14, %c0_15, %c0_16], %26 {strides = array<i32>} : memref<1x16x128xf32, #tpu.memory_space<vmem>>, vector<1x16x128xf32>,
    %cst_17 = arith.constant dense<0.000000e+00> : vector<128xf32>
    %27 = vector.multi_reduction <add>, %23, %cst_17 [0] : vector<16x128xf32> to vector<128xf32>
    %28 = vector.shape_cast %27 : vector<128xf32> to vector<1x128xf32>
    %29 = arith.mulf %23, %23 : vector<16x128xf32>
    %cst_18 = arith.constant dense<0.000000e+00> : vector<128xf32>
    %30 = vector.multi_reduction <add>, %29, %cst_18 [0] : vector<16x128xf32> to vector<128xf32>
    %31 = vector.shape_cast %30 : vector<128xf32> to vector<1x128xf32>
    %32 = tpu.concatenate %28, %31 in 0 : vector<1x128xf32>, vector<1x128xf32> -> vector<2x128xf32>
    %c0_19 = arith.constant 0 : index
    %c0_20 = arith.constant 0 : index
    %c0_21 = arith.constant 0 : index
    %33 = vector.load %arg5[%c0_19, %c0_20, %c0_21] : memref<1x2x128xf32, #tpu.memory_space<vmem>>, vector<1x2x128xf32>
    %34 = vector.shape_cast %33 : vector<1x2x128xf32> to vector<2x128xf32>
    %35 = vector.shape_cast %32 : vector<2x128xf32> to vector<1x2x128xf32>
    tpu.vector_store %arg5[%c0_19, %c0_20, %c0_21], %35 {strides = array<i32>} : memref<1x2x128xf32, #tpu.memory_space<vmem>>, vector<1x2x128xf32>,
    return
  }
  func.func @transform_0(%arg0: i32, %arg1: i32) -> (i32, i32, i32) {
    %c0_i32 = arith.constant 0 : i32
    %c0_i32_0 = arith.constant 0 : i32
    %c0_i32_1 = arith.constant 0 : i32
    return %arg0, %c0_i32, %c0_i32_0 : i32, i32, i32
  }
  func.func @transform_1(%arg0: i32, %arg1: i32) -> (i32, i32, i32) {
    %c0_i32 = arith.constant 0 : i32
    %c0_i32_0 = arith.constant 0 : i32
    %c0_i32_1 = arith.constant 0 : i32
    %c0_i32_2 = arith.constant 0 : i32
    return %c0_i32, %c0_i32_0, %c0_i32_1 : i32, i32, i32
  }
  func.func @transform_2(%arg0: i32, %arg1: i32) -> (i32, i32, i32) {
    %c0_i32 = arith.constant 0 : i32
    %c0_i32_0 = arith.constant 0 : i32
    return %arg0, %arg1, %c0_i32 : i32, i32, i32
  }
  func.func @transform_3(%arg0: i32, %arg1: i32) -> (i32, i32, i32) {
    %c1_i32 = arith.constant 1 : i32
    %0 = arith.muli %arg0, %c1_i32 : i32
    %1 = arith.addi %0, %arg1 : i32
    %c0_i32 = arith.constant 0 : i32
    %c0_i32_0 = arith.constant 0 : i32
    %c0_i32_1 = arith.constant 0 : i32
    return %1, %c0_i32, %c0_i32_0 : i32, i32, i32
  }
}

</mosaic_0001>

<llo_original>
// kernel: tpu_custom_call.1
$region0: #{tpu_custom_call.1}
  #allocation0 [shape = 'u32[]', space=smem, size = 0x4, offset = 0x4, fixed_abs, tag = 'smem constant byte address 0x4 - core index']
  #allocation1 [shape = 'u32[144,128]{1,0:T(1,128)}', space=vmem, size = 0x12000, scoped, tag = 'internal scratch']
  %s0 = inlined_call_operand.vmem [shape: f32[2,18,64], index: 0, kind: input, shape index: {}]
  %s1 = inlined_call_operand.hbm [shape: f32[3,64,128], index: 1, kind: input, shape index: {}]
  %s2 = inlined_call_operand.hbm [shape: f32[2,16,128], index: 2, kind: output, shape index: {0}]
  %s3 = inlined_call_operand.hbm [shape: f32[2,2,128], index: 3, kind: output, shape index: {1}]
  %4 = xla_tuple %s2, %s3
  %s5 = sld [smem:[#allocation0]]
  $region53: #{tpu_custom_call.1} parent=0
    _
  %s7 = ssub.s32 1, %s5
  %s8 = scalar_select 0, %s7, %s5
  $region1: #{tpu_custom_call.1} parent=0
    #allocation2 [shape = 'u8[98304]{0}', space=vmem, size = 0x18000, scoped, tag = 'input window, operand 1, single buffered']
    #allocation3 [shape = 's32[2]{0}', space=sflag, size = 0x8, scoped, tag = 'scoped memory for tpu_custom_call.1']
    #allocation4 [shape = 's32[2]{0}', space=sflag, size = 0x8, scoped, tag = 'scoped memory for tpu_custom_call.1']
    #allocation5 [shape = 'u8[16384]{0}', space=vmem, size = 0x4000, scoped, tag = 'output window, operand 0']
    #allocation6 [shape = 'u8[2048]{0}', space=vmem, size = 0x800, scoped, tag = 'output window, operand 1']
    #allocation7 [shape = 's32[2]{0}', space=sflag, size = 0x8, scoped, tag = 'scoped memory for tpu_custom_call.1']
    %9 = vsyncpa [#allocation3], 0
    %10 = vsyncpa [#allocation4], 0
    %s11 = scalar_lea.sflag [#allocation4], 1
    %12 = vsyncpa %s11, 0
    %13 = vsyncpa [#allocation7], 0
    %s14 = scalar_lea.sflag [#allocation7], 1
    %15 = vsyncpa %s14, 0
    loop: start=0, step=1, limit=4
    $region2: #{tpu_custom_call.1} parent=1 // loop_pre_header
      _
    $region3: #{tpu_custom_call.1} parent=1 // loop_header
      %s17 = sphi 0, %s21
      %p18 = scmp.ge.s32.totalorder %s17, 4
      %s24 = sphi 0, %s36
      %s25 = sphi 0, %s32
      %s26 = sphi 0, %s24
      %s27 = sphi 0, %s25
      %s28 = sphi 0, %s26
      %s29 = sphi 0, %s27
      %s39 = sphi 0, %s41
      %s42 = sphi 0, %s39
      %s43 = sphi 0, %s42
      %s59 = sphi 0, %s43
      %s63 = sphi 0, %s63
      %s65 = sphi 0, %s63
      %s66 = sphi 0, %s65
      %s80 = sphi 0, %s66
      %s88 = sphi 0, %s90
      %s91 = sphi 0, %s88
      %s92 = sphi 0, %s91
      %s108 = sphi 0, %s92
      %s116 = sphi 0, %s118
      %s119 = sphi 0, %s116
      %s120 = sphi 0, %s119
      %s136 = sphi 0, %s120
    $region4: #{tpu_custom_call.1} parent=1 // loop_header_branch
      %20 = sbr.rel (%p18) target = $region8
    $region5: #{tpu_custom_call.1} parent=1 // loop_body
      %s22 = ssub.s32 %s17, 1
      %s23 = ssub.s32 %s17, 2
      %s30 = sadd.s32 1, %s25
      %p31 = scmp.ge.s32.totalorder %s30, 1
      %s32 = scalar_select %p31, 0, %s30
      %s33 = sadd.s32 1, %s24
      %s34 = scalar_select %p31, %s33, %s24
      %p35 = scmp.ge.s32.totalorder %s34, 2
      %s36 = scalar_select %p35, 0, %s34
      %s37 = ssub.s32 %s24, %s36
      %p38 = scmp.eq.s32.totalorder %s37, 0
      %s40 = sadd.s32 %s39, 1
      %s41 = scalar_select %p38, %s39, %s40
      %p44 = pneg %p38
      %p45 = scmp.eq.s32.totalorder %s17, 1
      %p46 = por %p44, %p45
      %p47 = scmp.ne.s32.totalorder %s39, %s42
      %p48 = scmp.eq.s32.totalorder %s17, 0
      %p49 = por %p47, %p48
      %p50 = scmp.ne.s32.totalorder %s39, %s42
      %p51 = scmp.eq.s32.totalorder %s22, 1
      %p52 = por %p50, %p51
      %p53 = scmp.ne.s32.totalorder %s42, %s43
      %p54 = scmp.eq.s32.totalorder %s22, 0
      %p55 = por %p53, %p54
      %p56 = scmp.ne.s32.totalorder %s42, %s43
      %p57 = scmp.eq.s32.totalorder %s23, 1
      %p58 = por %p56, %p57
      %p60 = scmp.ne.s32.totalorder %s43, %s59
      %p61 = scmp.eq.s32.totalorder %s23, 0
      %p62 = por %p60, %p61
      %s64 = sadd.s32 %s63, 1
      %p67 = scmp.eq.s32.totalorder %s17, 1
      %p68 = scmp.ne.s32.totalorder %s63, %s65
      %p69 = scmp.eq.s32.totalorder %s17, 0
      %p70 = por %p68, %p69
      %p71 = scmp.ne.s32.totalorder %s63, %s65
      %p72 = scmp.eq.s32.totalorder %s22, 1
      %p73 = por %p71, %p72
      %p74 = scmp.ne.s32.totalorder %s65, %s66
      %p75 = scmp.eq.s32.totalorder %s22, 0
      %p76 = por %p74, %p75
      %p77 = scmp.ne.s32.totalorder %s65, %s66
      %p78 = scmp.eq.s32.totalorder %s23, 1
      %p79 = por %p77, %p78
      %p81 = scmp.ne.s32.totalorder %s66, %s80
      %p82 = scmp.eq.s32.totalorder %s23, 0
      %p83 = por %p81, %p82
      %s84 = ssub.s32 %s24, %s36
      %s85 = ssub.s32 %s25, %s32
      %s86 = sor.u32 %s84, %s85
      %p87 = scmp.eq.s32.totalorder %s86, 0
      %s89 = sadd.s32 %s88, 1
      %s90 = scalar_select %p87, %s88, %s89
      %p93 = pneg %p87
      %p94 = scmp.eq.s32.totalorder %s17, 1
      %p95 = por %p93, %p94
      %p96 = scmp.ne.s32.totalorder %s88, %s91
      %p97 = scmp.eq.s32.totalorder %s17, 0
      %p98 = por %p96, %p97
      %p99 = scmp.ne.s32.totalorder %s88, %s91
      %p100 = scmp.eq.s32.totalorder %s22, 1
      %p101 = por %p99, %p100
      %p102 = scmp.ne.s32.totalorder %s91, %s92
      %p103 = scmp.eq.s32.totalorder %s22, 0
      %p104 = por %p102, %p103
      %p105 = scmp.ne.s32.totalorder %s91, %s92
      %p106 = scmp.eq.s32.totalorder %s23, 1
      %p107 = por %p105, %p106
      %p109 = scmp.ne.s32.totalorder %s92, %s108
      %p110 = scmp.eq.s32.totalorder %s23, 0
      %p111 = por %p109, %p110
      %s112 = sadd.s32 %s24, %s25
      %s113 = sadd.s32 %s36, %s32
      %s114 = ssub.s32 %s112, %s113
      %p115 = scmp.eq.s32.totalorder %s114, 0
      %s117 = sadd.s32 %s116, 1
      %s118 = scalar_select %p115, %s116, %s117
      %p121 = pneg %p115
      %p122 = scmp.eq.s32.totalorder %s17, 1
      %p123 = por %p121, %p122
      %p124 = scmp.ne.s32.totalorder %s116, %s119
      %p125 = scmp.eq.s32.totalorder %s17, 0
      %p126 = por %p124, %p125
      %p127 = scmp.ne.s32.totalorder %s116, %s119
      %p128 = scmp.eq.s32.totalorder %s22, 1
      %p129 = por %p127, %p128
      %p130 = scmp.ne.s32.totalorder %s119, %s120
      %p131 = scmp.eq.s32.totalorder %s22, 0
      %p132 = por %p130, %p131
      %p133 = scmp.ne.s32.totalorder %s119, %s120
      %p134 = scmp.eq.s32.totalorder %s23, 1
      %p135 = por %p133, %p134
      %p137 = scmp.ne.s32.totalorder %s120, %s136
      %p138 = scmp.eq.s32.totalorder %s23, 0
      %p139 = por %p137, %p138
      %p140 = scmp.le.s32.totalorder 1, %s17
      %p141 = scmp.lt.s32.totalorder %s17, 3
      %p142 = pnand %p140, %p141
      %p143 = pneg %p142
      // Predicated region
      $region9: #{tpu_custom_call.1} parent=5 // pred_check
        _
      $region10: #{tpu_custom_call.1} parent=5 // pred_check_branch
        %145 = sbr.rel (%p142) target = $region12
      $region11: #{tpu_custom_call.1} parent=5 // pred_region
        %s146 = ssub.s32 %s17, 1
        // Predicated region
        $region13: #{tpu_custom_call.1} parent=11 // pred_check
          %p147 = pneg %p76
        $region14: #{tpu_custom_call.1} parent=11 // pred_check_branch
          %149 = sbr.rel (%p147) target = $region16
        $region15: #{tpu_custom_call.1} parent=11 // pred_region
          %s151 = ssub.s32 3072, 3072
          %152 = vsyncadd [#allocation3], %s151
          %s153 = sshll.u32 [#allocation2], 4
          %s154 = int_to_ptr.vmem [resolvable:$true] %s153
          %159 = dma.hbm_to_vmem [thread:$0]  %s1, 3072, %s154, [#allocation3], 128, 128, 8
        $region16: #{tpu_custom_call.1} parent=11 // pred_fallthru
          _
      $region12: #{tpu_custom_call.1} parent=5 // pred_fallthru
        _
      %p160 = scmp.lt.s32.totalorder %s17, 2
      // Predicated region
      $region17: #{tpu_custom_call.1} parent=5 // pred_check
        %p161 = pneg %p160
      $region18: #{tpu_custom_call.1} parent=5 // pred_check_branch
        %163 = sbr.rel (%p161) target = $region20
      $region19: #{tpu_custom_call.1} parent=5 // pred_region
        // Predicated region
        $region21: #{tpu_custom_call.1} parent=19 // pred_check
          %p164 = pneg %p49
        $region22: #{tpu_custom_call.1} parent=19 // pred_check_branch
          %166 = sbr.rel (%p164) target = $region24
        $region23: #{tpu_custom_call.1} parent=19 // pred_region
          %p167 = scmp.lt.s32.totalorder %s24, 1
          %s168 = scalar_select %p167, %s24, 1
          %s169 = smul.addr %s168, 3
          %s170 = smul.addr %s169, 8
          %s171 = scalar_lea.vmem %s0, %s170
        $region24: #{tpu_custom_call.1} parent=19 // pred_fallthru
          _
      $region20: #{tpu_custom_call.1} parent=5 // pred_fallthru
        _
      %p172 = scmp.le.s32.totalorder 1, %s17
      %p173 = scmp.lt.s32.totalorder %s17, 3
      %p174 = pnand %p172, %p173
      %p175 = pneg %p174
      // Predicated region
      $region25: #{tpu_custom_call.1} parent=5 // pred_check
        _
      $region26: #{tpu_custom_call.1} parent=5 // pred_check_branch
        %177 = sbr.rel (%p174) target = $region28
      $region27: #{tpu_custom_call.1} parent=5 // pred_region
        %s178 = ssub.s32 %s17, 1
        // Predicated region
        $region29: #{tpu_custom_call.1} parent=27 // pred_check
          %p179 = pneg %p76
        $region30: #{tpu_custom_call.1} parent=27 // pred_check_branch
          %181 = sbr.rel (%p179) target = $region32
        $region31: #{tpu_custom_call.1} parent=27 // pred_region
          %182 = dma.done [#allocation3], 3072
        $region32: #{tpu_custom_call.1} parent=27 // pred_fallthru
          _
        %p183 = scmp.lt.s32.totalorder %s26, 1
        %s184 = scalar_select %p183, %s26, 1
        %s185 = smul.addr %s184, 3
        %s186 = smul.addr %s185, 8
        %s187 = scalar_lea.vmem %s0, %s186
        %p188 = pneg %p55
        %p189 = pneg %p52
        %p190 = pneg %p76
        %p191 = pneg %p73
        %p192 = pneg %p104
        %p193 = pneg %p101
        %s194 = sand.u32 %s91, 1
        %s195 = scalar_lea.sflag [#allocation4], %s194
        %s196 = sand.u32 %s91, 1
        %s197 = smul.addr %s196, 16
        %s198 = scalar_lea.vmem [#allocation5], %s197
        %p199 = pneg %p132
        %p200 = pneg %p129
        %s201 = sand.u32 %s119, 1
        %s202 = scalar_lea.sflag [#allocation7], %s201
        %s203 = sand.u32 %s119, 1
        %s204 = smul.addr %s203, 2
        %s205 = scalar_lea.vmem [#allocation6], %s204
        %p206 = scmp.lt.s32.totalorder %s26, 1
        %s207 = scalar_select %p206, %s26, 1
        %s208 = smul.addr %s207, 3
        %s209 = smul.addr %s208, 8
        %s210 = scalar_lea.vmem %s0, %s209
        %s211 = smul.u32 2, %s27
        %s212 = sadd.s32 %s26, %s27
        %s213 = smul.u32 %s27, 16
        %s214 = scalar_lea.vmem %s210, %s213
        %v215 = vld [vmem:[%s214] sm:$0xff]
        %v216 = vld [vmem:[%s214 + $0x8] sm:$0xff]
        %v217 = vld [vmem:[#allocation2] sm:$0xff]
        %v218 = vld [vmem:[#allocation2 + $0x8] sm:$0xff]
        %v219 = vld [vmem:[#allocation2 + $0x10] sm:$0xff]
        %v220 = vld [vmem:[#allocation2 + $0x18] sm:$0xff]
        %v221 = vld [vmem:[#allocation2 + $0x20] sm:$0xff]
        %v222 = vld [vmem:[#allocation2 + $0x28] sm:$0xff]
        %v223 = vld [vmem:[#allocation2 + $0x30] sm:$0xff]
        %v224 = vld [vmem:[#allocation2 + $0x38] sm:$0xff]
        %s225 = sadd.s32 %s213, 1
        %s226 = scalar_lea.vmem %s210, %s225
        %v227 = vld [vmem:[%s226] sm:$0xff]
        %v228 = vld [vmem:[%s226 + $0x8] sm:$0xff]
        %s229 = scalar_lea.vmem [#allocation2], 64
        %v230 = vld [vmem:[%s229] sm:$0xff]
        %v231 = vld [vmem:[%s229 + $0x8] sm:$0xff]
        %v232 = vld [vmem:[%s229 + $0x10] sm:$0xff]
        %v233 = vld [vmem:[%s229 + $0x18] sm:$0xff]
        %v234 = vld [vmem:[%s229 + $0x20] sm:$0xff]
        %v235 = vld [vmem:[%s229 + $0x28] sm:$0xff]
        %v236 = vld [vmem:[%s229 + $0x30] sm:$0xff]
        %v237 = vld [vmem:[%s229 + $0x38] sm:$0xff]
        %vm238 = vcmask 523264
        %v240 = vsel %vm238, %v227, 0
        %v243 = vsel %vm238, %v228, 0
        %245 = vmatprep.subr.mxu0 0.0
        %246 = vmatpush1.msra.mxu0 %v230
        %247 = vmatprep.subr.mxu0 0.0
        %248 = vmatpush1.msra.mxu0 %v231
        %249 = vmatprep.subr.mxu0 0.0
        %250 = vmatpush1.msra.mxu0 %v232
        %251 = vmatprep.subr.mxu0 0.0
        %252 = vmatpush1.msra.mxu0 %v233
        %253 = vmatprep.subr.mxu0 0.0
        %254 = vmatpush1.msra.mxu0 %v234
        %255 = vmatprep.subr.mxu0 0.0
        %256 = vmatpush1.msra.mxu0 %v235
        %257 = vmatprep.subr.mxu0 0.0
        %258 = vmatpush1.msra.mxu0 %v236
        %259 = vmatprep.subr.mxu0 0.0
        %260 = vmatpush1.msra.mxu0 %v237
        %261 = vmatprep.subr.mxu0 0.0
        %262 = vmatpush1.msra.mxu0 0.0
        %263 = vmatprep.subr.mxu0 0.0
        %264 = vmatpush1.msra.mxu0 0.0
        %265 = vmatprep.subr.mxu0 0.0
        %266 = vmatpush1.msra.mxu0 0.0
        %267 = vmatprep.subr.mxu0 0.0
        %268 = vmatpush1.msra.mxu0 0.0
        %269 = vmatprep.subr.mxu0 0.0
        %270 = vmatpush1.msra.mxu0 0.0
        %271 = vmatprep.subr.mxu0 0.0
        %272 = vmatpush1.msra.mxu0 0.0
        %273 = vmatprep.subr.mxu0 0.0
        %274 = vmatpush1.msra.mxu0 0.0
        %275 = vmatprep.subr.mxu0 0.0
        %276 = vmatpush1.msra.mxu0 0.0
        %277 = vmatprep.subr.mxu0 0.0
        %278 = vmatpush1.msra.mxu0 0.0
        %279 = vmatprep.subr.mxu0 0.0
        %280 = vmatpush1.msra.mxu0 0.0
        %281 = vmatprep.subr.mxu0 0.0
        %282 = vmatpush1.msra.mxu0 0.0
        %283 = vmatprep.subr.mxu0 0.0
        %284 = vmatpush1.msra.mxu0 0.0
        %285 = vmatprep.subr.mxu0 0.0
        %286 = vmatpush1.msra.mxu0 0.0
        %287 = vmatprep.subr.mxu0 0.0
        %288 = vmatpush1.msra.mxu0 0.0
        %289 = vmatprep.subr.mxu0 0.0
        %290 = vmatpush1.msra.mxu0 0.0
        %291 = vmatprep.subr.mxu0 0.0
        %292 = vmatpush1.msra.mxu0 0.0
        %293 = vmatprep.subr.mxu0 0.0
        %294 = vmatpush1.msra.mxu0 0.0
        %295 = vmatprep.subr.mxu0 0.0
        %296 = vmatpush1.msra.mxu0 0.0
        %297 = vmatprep.subr.mxu0 0.0
        %298 = vmatpush1.msra.mxu0 0.0
        %299 = vmatprep.subr.mxu0 0.0
        %300 = vmatpush1.msra.mxu0 0.0
        %301 = vmatprep.subr.mxu0 0.0
        %302 = vmatpush1.msra.mxu0 0.0
        %303 = vmatprep.subr.mxu0 0.0
        %304 = vmatpush1.msra.mxu0 0.0
        %305 = vmatprep.subr.mxu0 0.0
        %306 = vmatpush1.msra.mxu0 0.0
        %307 = vmatprep.subr.mxu0 0.0
        %308 = vmatpush1.msra.mxu0 0.0
        %309 = vmatprep.mubr.f32.mxu0 0.0
        %310 = vmatmul.mubr.f32.gmra.mrb[0].mxu0 %v240
        %v311 = vpop.f32.mrb[0].mxu0
        %v312 = vadd.f32 0.0, %v311
        %v313 = vpop.f32.mrb[0].mxu0
        %314 = vmatprep.mubr.f32.mxu0 0.0
        %315 = vmatmul.mubr.f32.gmra.mrb[0].mxu0 %v243
        %v316 = vpop.f32.mrb[0].mxu0
        %v317 = vadd.f32 0.0, %v316
        %v318 = vpop.f32.mrb[0].mxu0
        %319 = vdwg.mxu0
        %v321 = vsel %vm238, %v215, 0
        %v324 = vsel %vm238, %v216, 0
        %326 = vmatprep.subr.mxu0 0.0
        %327 = vmatpush1.msra.mxu0 %v217
        %328 = vmatprep.subr.mxu0 0.0
        %329 = vmatpush1.msra.mxu0 %v218
        %330 = vmatprep.subr.mxu0 0.0
        %331 = vmatpush1.msra.mxu0 %v219
        %332 = vmatprep.subr.mxu0 0.0
        %333 = vmatpush1.msra.mxu0 %v220
        %334 = vmatprep.subr.mxu0 0.0
        %335 = vmatpush1.msra.mxu0 %v221
        %336 = vmatprep.subr.mxu0 0.0
        %337 = vmatpush1.msra.mxu0 %v222
        %338 = vmatprep.subr.mxu0 0.0
        %339 = vmatpush1.msra.mxu0 %v223
        %340 = vmatprep.subr.mxu0 0.0
        %341 = vmatpush1.msra.mxu0 %v224
        %342 = vmatprep.subr.mxu0 0.0
        %343 = vmatpush1.msra.mxu0 0.0
        %344 = vmatprep.subr.mxu0 0.0
        %345 = vmatpush1.msra.mxu0 0.0
        %346 = vmatprep.subr.mxu0 0.0
        %347 = vmatpush1.msra.mxu0 0.0
        %348 = vmatprep.subr.mxu0 0.0
        %349 = vmatpush1.msra.mxu0 0.0
        %350 = vmatprep.subr.mxu0 0.0
        %351 = vmatpush1.msra.mxu0 0.0
        %352 = vmatprep.subr.mxu0 0.0
        %353 = vmatpush1.msra.mxu0 0.0
        %354 = vmatprep.subr.mxu0 0.0
        %355 = vmatpush1.msra.mxu0 0.0
        %356 = vmatprep.subr.mxu0 0.0
        %357 = vmatpush1.msra.mxu0 0.0
        %358 = vmatprep.subr.mxu0 0.0
        %359 = vmatpush1.msra.mxu0 0.0
        %360 = vmatprep.subr.mxu0 0.0
        %361 = vmatpush1.msra.mxu0 0.0
        %362 = vmatprep.subr.mxu0 0.0
        %363 = vmatpush1.msra.mxu0 0.0
        %364 = vmatprep.subr.mxu0 0.0
        %365 = vmatpush1.msra.mxu0 0.0
        %366 = vmatprep.subr.mxu0 0.0
        %367 = vmatpush1.msra.mxu0 0.0
        %368 = vmatprep.subr.mxu0 0.0
        %369 = vmatpush1.msra.mxu0 0.0
        %370 = vmatprep.subr.mxu0 0.0
        %371 = vmatpush1.msra.mxu0 0.0
        %372 = vmatprep.subr.mxu0 0.0
        %373 = vmatpush1.msra.mxu0 0.0
        %374 = vmatprep.subr.mxu0 0.0
        %375 = vmatpush1.msra.mxu0 0.0
        %376 = vmatprep.subr.mxu0 0.0
        %377 = vmatpush1.msra.mxu0 0.0
        %378 = vmatprep.subr.mxu0 0.0
        %379 = vmatpush1.msra.mxu0 0.0
        %380 = vmatprep.subr.mxu0 0.0
        %381 = vmatpush1.msra.mxu0 0.0
        %382 = vmatprep.subr.mxu0 0.0
        %383 = vmatpush1.msra.mxu0 0.0
        %384 = vmatprep.subr.mxu0 0.0
        %385 = vmatpush1.msra.mxu0 0.0
        %386 = vmatprep.subr.mxu0 0.0
        %387 = vmatpush1.msra.mxu0 0.0
        %388 = vmatprep.subr.mxu0 0.0
        %389 = vmatpush1.msra.mxu0 0.0
        %390 = vmatprep.mubr.f32.mxu0 0.0
        %391 = vmatmul.mubr.f32.gmra.mrb[0].mxu0 %v321
        %v392 = vpop.f32.mrb[0].mxu0
        %v393 = vadd.f32 %v312, %v392
        %v394 = vpop.f32.mrb[0].mxu0
        %395 = vmatprep.mubr.f32.mxu0 0.0
        %396 = vmatmul.mubr.f32.gmra.mrb[0].mxu0 %v324
        %v397 = vpop.f32.mrb[0].mxu0
        %v398 = vadd.f32 %v317, %v397
        %v399 = vpop.f32.mrb[0].mxu0
        %400 = vdwg.mxu0
        %s401 = sadd.s32 %s213, 2
        %s402 = scalar_lea.vmem %s210, %s401
        %v403 = vld [vmem:[%s402] sm:$0xff]
        %v404 = vld [vmem:[%s402 + $0x8] sm:$0xff]
        %s405 = scalar_lea.vmem [#allocation2], 128
        %v406 = vld [vmem:[%s405] sm:$0xff]
        %v407 = vld [vmem:[%s405 + $0x8] sm:$0xff]
        %v408 = vld [vmem:[%s405 + $0x10] sm:$0xff]
        %v409 = vld [vmem:[%s405 + $0x18] sm:$0xff]
        %v410 = vld [vmem:[%s405 + $0x20] sm:$0xff]
        %v411 = vld [vmem:[%s405 + $0x28] sm:$0xff]
        %v412 = vld [vmem:[%s405 + $0x30] sm:$0xff]
        %v413 = vld [vmem:[%s405 + $0x38] sm:$0xff]
        %v415 = vsel %vm238, %v403, 0
        %v418 = vsel %vm238, %v404, 0
        %420 = vmatprep.subr.mxu0 0.0
        %421 = vmatpush1.msra.mxu0 %v406
        %422 = vmatprep.subr.mxu0 0.0
        %423 = vmatpush1.msra.mxu0 %v407
        %424 = vmatprep.subr.mxu0 0.0
        %425 = vmatpush1.msra.mxu0 %v408
        %426 = vmatprep.subr.mxu0 0.0
        %427 = vmatpush1.msra.mxu0 %v409
        %428 = vmatprep.subr.mxu0 0.0
        %429 = vmatpush1.msra.mxu0 %v410
        %430 = vmatprep.subr.mxu0 0.0
        %431 = vmatpush1.msra.mxu0 %v411
        %432 = vmatprep.subr.mxu0 0.0
        %433 = vmatpush1.msra.mxu0 %v412
        %434 = vmatprep.subr.mxu0 0.0
        %435 = vmatpush1.msra.mxu0 %v413
        %436 = vmatprep.subr.mxu0 0.0
        %437 = vmatpush1.msra.mxu0 0.0
        %438 = vmatprep.subr.mxu0 0.0
        %439 = vmatpush1.msra.mxu0 0.0
        %440 = vmatprep.subr.mxu0 0.0
        %441 = vmatpush1.msra.mxu0 0.0
        %442 = vmatprep.subr.mxu0 0.0
        %443 = vmatpush1.msra.mxu0 0.0
        %444 = vmatprep.subr.mxu0 0.0
        %445 = vmatpush1.msra.mxu0 0.0
        %446 = vmatprep.subr.mxu0 0.0
        %447 = vmatpush1.msra.mxu0 0.0
        %448 = vmatprep.subr.mxu0 0.0
        %449 = vmatpush1.msra.mxu0 0.0
        %450 = vmatprep.subr.mxu0 0.0
        %451 = vmatpush1.msra.mxu0 0.0
        %452 = vmatprep.subr.mxu0 0.0
        %453 = vmatpush1.msra.mxu0 0.0
        %454 = vmatprep.subr.mxu0 0.0
        %455 = vmatpush1.msra.mxu0 0.0
        %456 = vmatprep.subr.mxu0 0.0
        %457 = vmatpush1.msra.mxu0 0.0
        %458 = vmatprep.subr.mxu0 0.0
        %459 = vmatpush1.msra.mxu0 0.0
        %460 = vmatprep.subr.mxu0 0.0
        %461 = vmatpush1.msra.mxu0 0.0
        %462 = vmatprep.subr.mxu0 0.0
        %463 = vmatpush1.msra.mxu0 0.0
        %464 = vmatprep.subr.mxu0 0.0
        %465 = vmatpush1.msra.mxu0 0.0
        %466 = vmatprep.subr.mxu0 0.0
        %467 = vmatpush1.msra.mxu0 0.0
        %468 = vmatprep.subr.mxu0 0.0
        %469 = vmatpush1.msra.mxu0 0.0
        %470 = vmatprep.subr.mxu0 0.0
        %471 = vmatpush1.msra.mxu0 0.0
        %472 = vmatprep.subr.mxu0 0.0
        %473 = vmatpush1.msra.mxu0 0.0
        %474 = vmatprep.subr.mxu0 0.0
        %475 = vmatpush1.msra.mxu0 0.0
        %476 = vmatprep.subr.mxu0 0.0
        %477 = vmatpush1.msra.mxu0 0.0
        %478 = vmatprep.subr.mxu0 0.0
        %479 = vmatpush1.msra.mxu0 0.0
        %480 = vmatprep.subr.mxu0 0.0
        %481 = vmatpush1.msra.mxu0 0.0
        %482 = vmatprep.subr.mxu0 0.0
        %483 = vmatpush1.msra.mxu0 0.0
        %484 = vmatprep.mubr.f32.mxu0 0.0
        %485 = vmatmul.mubr.f32.gmra.mrb[0].mxu0 %v415
        %v486 = vpop.f32.mrb[0].mxu0
        %v487 = vadd.f32 0.0, %v486
        %v488 = vpop.f32.mrb[0].mxu0
        %489 = vmatprep.mubr.f32.mxu0 0.0
        %490 = vmatmul.mubr.f32.gmra.mrb[0].mxu0 %v418
        %v491 = vpop.f32.mrb[0].mxu0
        %v492 = vadd.f32 0.0, %v491
        %v493 = vpop.f32.mrb[0].mxu0
        %494 = vdwg.mxu0
        %v495 = vadd.f32 %v393, %v487
        %v496 = vadd.f32 %v398, %v492
        %497 = vst [vmem:[%s198] sm:$0xff] %v495
        %498 = vst [vmem:[%s198 + $0x8] sm:$0xff] %v496
        %v499 = vadd.f32 %v495, %v496
        %v500 = vrot.slane %v499, 4
        %v501 = vadd.f32 %v499, %v500
        %v502 = vrot.slane %v501, 2
        %v503 = vadd.f32 %v501, %v502
        %v504 = vrot.slane %v503, 1
        %v505 = vadd.f32 %v503, %v504
        %v506 = vmul.f32 %v495, %v495
        %v507 = vmul.f32 %v496, %v496
        %v508 = vadd.f32 %v506, %v507
        %v509 = vrot.slane %v508, 4
        %v510 = vadd.f32 %v508, %v509
        %v511 = vrot.slane %v510, 2
        %v512 = vadd.f32 %v510, %v511
        %v513 = vrot.slane %v512, 1
        %v514 = vadd.f32 %v512, %v513
        %vm515 = vcmask 1040384
        %v516 = vsel %vm515, %v505, %v514
        %517 = vst [vmem:[%s205] sm:$0x3] %v516
        %s518 = sand.u32 %s91, 1
        %s519 = scalar_lea.sflag [#allocation4], %s518
        %s520 = sand.u32 %s91, 1
        %s521 = smul.addr %s520, 16
        %s522 = scalar_lea.vmem [#allocation5], %s521
        %s523 = sand.u32 %s119, 1
        %s524 = scalar_lea.sflag [#allocation7], %s523
        %s525 = sand.u32 %s119, 1
        %s526 = smul.addr %s525, 2
        %s527 = scalar_lea.vmem [#allocation6], %s526
        // Predicated region
        $region33: #{tpu_custom_call.1} parent=27 // pred_check
          %p528 = pneg %p101
        $region34: #{tpu_custom_call.1} parent=27 // pred_check_branch
          %530 = sbr.rel (%p528) target = $region36
        $region35: #{tpu_custom_call.1} parent=27 // pred_region
          %s531 = smul.u32 2, %s27
          %s533 = ssub.s32 256, 256
          %534 = vsyncadd %s519, %s533
          %s535 = smul.addr %s26, 2
          %s536 = sadd.s32 %s531, %s535
          %s537 = smul.addr %s536, 128
          %s538 = scalar_lea.hbm %s2, %s537
          %s539 = sshll.u32 %s522, 4
          %s540 = int_to_ptr.vmem [resolvable:$true] %s539
          %545 = dma.vmem_to_hbm [thread:$0]  %s540, 256, %s538, %s519, 128, 128, 8
        $region36: #{tpu_custom_call.1} parent=27 // pred_fallthru
          _
        // Predicated region
        $region37: #{tpu_custom_call.1} parent=27 // pred_check
          %p546 = pneg %p129
        $region38: #{tpu_custom_call.1} parent=27 // pred_check_branch
          %548 = sbr.rel (%p546) target = $region40
        $region39: #{tpu_custom_call.1} parent=27 // pred_region
          %s549 = sadd.s32 %s26, %s27
          %s551 = ssub.s32 32, 32
          %552 = vsyncadd %s524, %s551
          %s553 = smul.addr %s549, 32
          %s554 = scalar_lea.hbm %s3, %s553
          %s556 = sshll.u32 %s527, 4
          %s557 = int_to_ptr.vmem [resolvable:$true] %s556
          %559 = dma.vmem_to_hbm [thread:$0]  %s557, 32, %s554, %s524
        $region40: #{tpu_custom_call.1} parent=27 // pred_fallthru
          _
      $region28: #{tpu_custom_call.1} parent=5 // pred_fallthru
        _
      %p560 = scmp.le.s32.totalorder 2, %s17
      // Predicated region
      $region41: #{tpu_custom_call.1} parent=5 // pred_check
        %p561 = pneg %p560
      $region42: #{tpu_custom_call.1} parent=5 // pred_check_branch
        %563 = sbr.rel (%p561) target = $region44
      $region43: #{tpu_custom_call.1} parent=5 // pred_region
        %s564 = ssub.s32 %s17, 2
        // Predicated region
        $region45: #{tpu_custom_call.1} parent=43 // pred_check
          %p565 = pneg %p107
        $region46: #{tpu_custom_call.1} parent=43 // pred_check_branch
          %567 = sbr.rel (%p565) target = $region48
        $region47: #{tpu_custom_call.1} parent=43 // pred_region
          %s568 = sand.u32 %s92, 1
          %s569 = scalar_lea.sflag [#allocation4], %s568
          %s570 = sand.u32 %s92, 1
          %s571 = smul.addr %s570, 16
          %s572 = scalar_lea.vmem [#allocation5], %s571
          %573 = dma.done %s569, 256
        $region48: #{tpu_custom_call.1} parent=43 // pred_fallthru
          _
        // Predicated region
        $region49: #{tpu_custom_call.1} parent=43 // pred_check
          %p574 = pneg %p135
        $region50: #{tpu_custom_call.1} parent=43 // pred_check_branch
          %576 = sbr.rel (%p574) target = $region52
        $region51: #{tpu_custom_call.1} parent=43 // pred_region
          %s577 = sand.u32 %s120, 1
          %s578 = scalar_lea.sflag [#allocation7], %s577
          %s579 = sand.u32 %s120, 1
          %s580 = smul.addr %s579, 2
          %s581 = scalar_lea.vmem [#allocation6], %s580
          %582 = dma.done %s578, 32
        $region52: #{tpu_custom_call.1} parent=43 // pred_fallthru
          _
      $region44: #{tpu_custom_call.1} parent=5 // pred_fallthru
        _
    $region6: #{tpu_custom_call.1} parent=1 // loop_footer
      %s21 = sadd.s32 1, %s17
    $region7: #{tpu_custom_call.1} parent=1 // loop_footer_branch
      %16 = sbr.rel target = $region3
    $region8: #{tpu_custom_call.1} parent=1 // loop_exit
      _
    %583 = vsyncpa [#allocation3], 1
    %s584 = scalar_lea.sflag [#allocation3], 1
    %585 = vsyncpa %s584, 1
    %586 = vsyncpa [#allocation4], 1
    %s587 = scalar_lea.sflag [#allocation4], 1
    %588 = vsyncpa %s587, 1
    %589 = vsyncpa [#allocation7], 1
    %s590 = scalar_lea.sflag [#allocation7], 1
    %591 = vsyncpa %s590, 1

</llo_original>
